<compile_context>
chip_gen: v5e
topology: v5e:2x2
jax: 0.10.0
libtpu: 0.0.40
codegen_flags: <defaults>
</compile_context>

<pallas_src>
import jax
import jax.numpy as jnp
from jax import lax
from jax.experimental import pallas as pl
from jax.experimental.pallas import tpu as pltpu


def _round_up(x, m):
    return ((x + m - 1) // m) * m


def _projection_kernel(x_ref, gamma_ref, beta_ref, w1_ref, b1_ref,
                       w2_ref, b2_ref, o_ref):
    # x_ref: (TM, D_clip) tile of token rows; compute entirely in f32.
    x = x_ref[...].astype(jnp.float32)

    # ---- LayerNorm over the last (feature) dim, biased variance, eps=1e-5 ----
    mean = jnp.mean(x, axis=-1, keepdims=True)
    xc = x - mean
    var = jnp.mean(xc * xc, axis=-1, keepdims=True)
    xn = xc * lax.rsqrt(var + 1e-5)
    xn = xn * gamma_ref[...] + beta_ref[...]          # (TM, D_clip), f32 affine

    # ---- Linear 1: D_clip -> D_phi2 (operands in weight storage dtype,
    #      f32 accumulation) ----
    h = jnp.dot(xn.astype(w1_ref.dtype), w1_ref[...],
                preferred_element_type=jnp.float32)
    h = h + b1_ref[...]                               # (TM, D_phi2), f32

    # ---- GELU (exact, erf-based — PyTorch nn.GELU default) ----
    h = 0.5 * h * (1.0 + lax.erf(h * jnp.float32(0.7071067811865476)))

    # ---- Linear 2: D_phi2 -> D_phi2 ----
    y = jnp.dot(h.astype(w2_ref.dtype), w2_ref[...],
                preferred_element_type=jnp.float32)
    y = y + b2_ref[...]                               # (TM, D_phi2), f32

    o_ref[...] = y.astype(o_ref.dtype)


def projection_block(x, gamma, beta, w1, b1, w2, b2, *, tm=512):
    """x: (N, D_clip). Returns (N, D_phi2) in x.dtype.

    tm: target row tile (multiple of 8).  On v7x prefer a tm such that the
    resulting grid length is >= 2 so both TensorCores are used.
    """
    N, d_clip = x.shape
    d_phi2 = w1.shape[1]

    # ---- choose effective row tile + pad rows (handles ragged N) ----
    n8 = _round_up(N, 8)
    tm_eff = min(_round_up(tm, 8), n8)
    n_pad = _round_up(N, tm_eff)
    if n_pad != N:
        x = jnp.pad(x, ((0, n_pad - N), (0, 0)))      # zero rows: finite LN, sliced off
    steps = pl.cdiv(n_pad, tm_eff)

    # Present params as 2-D (1, D) so they broadcast cleanly in the kernel.
    # Keep the affine / bias params in f32 for numerics (they are tiny).
    gamma2 = gamma.reshape(1, d_clip).astype(jnp.float32)
    beta2 = beta.reshape(1, d_clip).astype(jnp.float32)
    b1_2 = b1.reshape(1, d_phi2).astype(jnp.float32)
    b2_2 = b2.reshape(1, d_phi2).astype(jnp.float32)

    full = lambda i: (0, 0)  # params / weights: same full block every grid step

    # ---- VMEM budget (double-buffered x/out tiles + weights + f32 temps) ----
    isz_x = jnp.dtype(x.dtype).itemsize
    isz_w = jnp.dtype(w1.dtype).itemsize
    vmem_est = (
        2 * tm_eff * d_clip * isz_x                       # x tile, double-buffered
        + 2 * tm_eff * d_phi2 * isz_x                     # out tile, double-buffered
        + 2 * (d_clip * d_phi2 + d_phi2 * d_phi2) * isz_w  # weights (worst case 2x)
        + tm_eff * (d_clip + 2 * d_phi2) * 4              # f32 intermediates (xn, h, y)
    )
    compiler_kwargs = dict(dimension_semantics=("parallel",))
    if vmem_est > (32 << 20):
        # Cap at 64 MiB so the same setting is safe on v7x (64 MiB physical VMEM).
        compiler_kwargs["vmem_limit_bytes"] = min(int(vmem_est * 3 // 2), 64 << 20)

    # ---- advisory cost estimate for XLA's scheduler ----
    cost = pl.CostEstimate(
        flops=int(2 * n_pad * d_clip * d_phi2 + 2 * n_pad * d_phi2 * d_phi2
                  + 10 * n_pad * (d_clip + d_phi2)),
        transcendentals=int(n_pad * d_phi2 + n_pad),      # erf + rsqrt
        bytes_accessed=int(n_pad * d_clip * isz_x + n_pad * d_phi2 * isz_x
                           + (d_clip * d_phi2 + d_phi2 * d_phi2) * isz_w
                           + 2 * (d_clip + d_phi2) * 4),
    )

    out = pl.pallas_call(
        _projection_kernel,
        out_shape=jax.ShapeDtypeStruct((n_pad, d_phi2), x.dtype),
        grid_spec=pltpu.PrefetchScalarGridSpec(
            num_scalar_prefetch=0,
            grid=(steps,),
            in_specs=[
                pl.BlockSpec((tm_eff, d_clip), lambda i: (i, 0)),   # x rows
                pl.BlockSpec((1, d_clip), full),                    # gamma
                pl.BlockSpec((1, d_clip), full),                    # beta
                pl.BlockSpec((d_clip, d_phi2), full),               # W1
                pl.BlockSpec((1, d_phi2), full),                    # b1
                pl.BlockSpec((d_phi2, d_phi2), full),               # W2
                pl.BlockSpec((1, d_phi2), full),                    # b2
            ],
            out_specs=pl.BlockSpec((tm_eff, d_phi2), lambda i: (i, 0)),
        ),
        compiler_params=pltpu.CompilerParams(**compiler_kwargs),
        cost_estimate=cost,
    )(x, gamma2, beta2, w1, b1_2, w2, b2_2)

    return out[:N] if n_pad != N else out


def _reference(x, gamma, beta, w1, b1, w2, b2):
    """Plain-JAX reference of the same math (f32)."""
    xf = x.astype(jnp.float32)
    mean = jnp.mean(xf, axis=-1, keepdims=True)
    var = jnp.mean((xf - mean) ** 2, axis=-1, keepdims=True)
    xn = (xf - mean) * lax.rsqrt(var + 1e-5) * gamma + beta
    h = xn @ w1.astype(jnp.float32) + b1
    h = 0.5 * h * (1.0 + lax.erf(h * jnp.float32(0.7071067811865476)))
    return h @ w2.astype(jnp.float32) + b2


if __name__ == "__main__":
    # Small shapes consistent with the module's forward:
    #   input_dim_CLIP = 32, input_dim_phi2 = 64, tokens: batch=2, seq=8
    B, S = 2, 8
    D_CLIP, D_PHI2 = 32, 64

    key = jax.random.PRNGKey(0)
    kx, kg, kb, kw1, kb1, kw2, kb2, kx2 = jax.random.split(key, 8)

    x = jax.random.normal(kx, (B, S, D_CLIP), dtype=jnp.float32)

    # Deterministic synthetic parameters (shapes from the module __init__).
    gamma = 1.0 + 0.01 * jax.random.normal(kg, (D_CLIP,), dtype=jnp.float32)
    beta = 0.01 * jax.random.normal(kb, (D_CLIP,), dtype=jnp.float32)
    w1 = 0.05 * jax.random.normal(kw1, (D_CLIP, D_PHI2), dtype=jnp.float32)
    b1 = 0.01 * jax.random.normal(kb1, (D_PHI2,), dtype=jnp.float32)
    w2 = 0.05 * jax.random.normal(kw2, (D_PHI2, D_PHI2), dtype=jnp.float32)
    b2 = 0.01 * jax.random.normal(kb2, (D_PHI2,), dtype=jnp.float32)

    # ---- 1) f32 end-to-end (exact-parity path) ----
    x2d = x.reshape(B * S, D_CLIP)
    out = projection_block(x2d, gamma, beta, w1, b1, w2, b2)
    jax.block_until_ready(out)
    ref = _reference(x2d, gamma, beta, w1, b1, w2, b2)
    assert out.shape == (B * S, D_PHI2)
    assert jnp.allclose(out, ref, atol=1e-4, rtol=1e-4), "f32 mismatch vs reference"

    # ---- 2) bf16 storage for x / W1 / W2 (halves HBM traffic), f32 accumulation ----
    x_bf = x2d.astype(jnp.bfloat16)
    w1_bf = w1.astype(jnp.bfloat16)
    w2_bf = w2.astype(jnp.bfloat16)
    out_bf = projection_block(x_bf, gamma, beta, w1_bf, b1, w2_bf, b2)
    jax.block_until_ready(out_bf)
    assert out_bf.dtype == jnp.bfloat16
    ref_bf = _reference(x_bf, gamma, beta, w1_bf, b1, w2_bf, b2)
    assert jnp.allclose(out_bf.astype(jnp.float32), ref_bf, atol=2e-2, rtol=2e-2), \
        "bf16 mismatch vs reference"

    # ---- 3) ragged row count (N=18, not a multiple of 8) exercises padding path ----
    x_rag = jax.random.normal(kx2, (18, D_CLIP), dtype=jnp.float32)
    out_rag = projection_block(x_rag, gamma, beta, w1, b1, w2, b2)
    jax.block_until_ready(out_rag)
    ref_rag = _reference(x_rag, gamma, beta, w1, b1, w2, b2)
    assert out_rag.shape == (18, D_PHI2)
    assert jnp.allclose(out_rag, ref_rag, atol=1e-4, rtol=1e-4), "ragged mismatch"

    print("KERNEL_OK")
</pallas_src>

<mosaic_0001>
module attributes {stable_mosaic.version = 11 : i64} {
  func.func @_projection_kernel(%arg0: i32, %arg1: memref<16x32xf32, #tpu.memory_space<vmem>>, %arg2: memref<1x32xf32, #tpu.memory_space<vmem>>, %arg3: memref<1x32xf32, #tpu.memory_space<vmem>>, %arg4: memref<32x64xf32, #tpu.memory_space<vmem>>, %arg5: memref<1x64xf32, #tpu.memory_space<vmem>>, %arg6: memref<64x64xf32, #tpu.memory_space<vmem>>, %arg7: memref<1x64xf32, #tpu.memory_space<vmem>>, %arg8: memref<16x64xf32, #tpu.memory_space<vmem>>) attributes {dimension_semantics = [#tpu.dimension_semantics<parallel>], iteration_bounds = array<i64: 1>, scalar_prefetch = 0 : i64, scratch_operands = 0 : i64, tpu.core_type = #tpu.core_type<tc>, window_params = [{transform_indices = @transform_0, window_bounds = array<i64: 16, 32>}, {pipeline_mode = #tpu.pipeline_mode<synchronous>, transform_indices = @transform_1, window_bounds = array<i64: 1, 32>}, {pipeline_mode = #tpu.pipeline_mode<synchronous>, transform_indices = @transform_2, window_bounds = array<i64: 1, 32>}, {pipeline_mode = #tpu.pipeline_mode<synchronous>, transform_indices = @transform_3, window_bounds = array<i64: 32, 64>}, {pipeline_mode = #tpu.pipeline_mode<synchronous>, transform_indices = @transform_4, window_bounds = array<i64: 1, 64>}, {pipeline_mode = #tpu.pipeline_mode<synchronous>, transform_indices = @transform_5, window_bounds = array<i64: 64, 64>}, {pipeline_mode = #tpu.pipeline_mode<synchronous>, transform_indices = @transform_6, window_bounds = array<i64: 1, 64>}, {transform_indices = @transform_7, window_bounds = array<i64: 16, 64>}]} {
    %c0 = arith.constant 0 : index
    %c0_0 = arith.constant 0 : index
    %0 = vector.load %arg1[%c0, %c0_0] : memref<16x32xf32, #tpu.memory_space<vmem>>, vector<16x32xf32>
    %cst = arith.constant dense<0.000000e+00> : vector<16xf32>
    %1 = vector.multi_reduction <add>, %0, %cst [1] : vector<16x32xf32> to vector<16xf32>
    %2 = vector.shape_cast %1 : vector<16xf32> to vector<16x1xf32>
    %cst_1 = arith.constant 3.200000e+01 : f32
    %3 = vector.broadcast %cst_1 : f32 to vector<16x1xf32>
    %4 = arith.divf %2, %3 : vector<16x1xf32>
    %5 = vector.broadcast %4 : vector<16x1xf32> to vector<16x32xf32>
    %6 = arith.subf %0, %5 : vector<16x32xf32>
    %7 = arith.mulf %6, %6 : vector<16x32xf32>
    %cst_2 = arith.constant dense<0.000000e+00> : vector<16xf32>
    %8 = vector.multi_reduction <add>, %7, %cst_2 [1] : vector<16x32xf32> to vector<16xf32>
    %9 = vector.shape_cast %8 : vector<16xf32> to vector<16x1xf32>
    %cst_3 = arith.constant 3.200000e+01 : f32
    %10 = vector.broadcast %cst_3 : f32 to vector<16x1xf32>
    %11 = arith.divf %9, %10 : vector<16x1xf32>
    %cst_4 = arith.constant 9.99999974E-6 : f32
    %12 = vector.broadcast %cst_4 : f32 to vector<16x1xf32>
    %13 = arith.addf %11, %12 : vector<16x1xf32>
    %14 = math.rsqrt %13 : vector<16x1xf32>
    %15 = vector.broadcast %14 : vector<16x1xf32> to vector<16x32xf32>
    %16 = arith.mulf %6, %15 : vector<16x32xf32>
    %c0_5 = arith.constant 0 : index
    %c0_6 = arith.constant 0 : index
    %17 = vector.load %arg2[%c0_5, %c0_6] : memref<1x32xf32, #tpu.memory_space<vmem>>, vector<1x32xf32>
    %18 = vector.broadcast %17 : vector<1x32xf32> to vector<16x32xf32>
    %19 = arith.mulf %16, %18 : vector<16x32xf32>
    %c0_7 = arith.constant 0 : index
    %c0_8 = arith.constant 0 : index
    %20 = vector.load %arg3[%c0_7, %c0_8] : memref<1x32xf32, #tpu.memory_space<vmem>>, vector<1x32xf32>
    %21 = vector.broadcast %20 : vector<1x32xf32> to vector<16x32xf32>
    %22 = arith.addf %19, %21 : vector<16x32xf32>
    %c0_9 = arith.constant 0 : index
    %c0_10 = arith.constant 0 : index
    %23 = vector.load %arg4[%c0_9, %c0_10] : memref<32x64xf32, #tpu.memory_space<vmem>>, vector<32x64xf32>
    %cst_11 = arith.constant dense<0.000000e+00> : vector<16x64xf32>
    %24 = tpu.matmul %22, %23, %cst_11 {dimension_numbers = #tpu.dot_dimension_numbers<[1], [0], [0], [1], [0, 0, 1, 1], [], []>} : vector<16x32xf32>, vector<32x64xf32>, vector<16x64xf32> -> vector<16x64xf32>
    %c0_12 = arith.constant 0 : index
    %c0_13 = arith.constant 0 : index
    %25 = vector.load %arg5[%c0_12, %c0_13] : memref<1x64xf32, #tpu.memory_space<vmem>>, vector<1x64xf32>
    %26 = vector.broadcast %25 : vector<1x64xf32> to vector<16x64xf32>
    %27 = arith.addf %24, %26 : vector<16x64xf32>
    %cst_14 = arith.constant 5.000000e-01 : f32
    %28 = vector.broadcast %cst_14 : f32 to vector<16x64xf32>
    %29 = arith.mulf %28, %27 : vector<16x64xf32>
    %cst_15 = arith.constant 0.707106769 : f32
    %30 = vector.broadcast %cst_15 : f32 to vector<16x64xf32>
    %31 = arith.mulf %27, %30 : vector<16x64xf32>
    %32 = math.erf %31 : vector<16x64xf32>
    %cst_16 = arith.constant 1.000000e+00 : f32
    %33 = vector.broadcast %cst_16 : f32 to vector<16x64xf32>
    %34 = arith.addf %33, %32 : vector<16x64xf32>
    %35 = arith.mulf %29, %34 : vector<16x64xf32>
    %c0_17 = arith.constant 0 : index
    %c0_18 = arith.constant 0 : index
    %36 = vector.load %arg6[%c0_17, %c0_18] : memref<64x64xf32, #tpu.memory_space<vmem>>, vector<64x64xf32>
    %cst_19 = arith.constant dense<0.000000e+00> : vector<16x64xf32>
    %37 = tpu.matmul %35, %36, %cst_19 {dimension_numbers = #tpu.dot_dimension_numbers<[1], [0], [0], [1], [0, 0, 1, 1], [], []>} : vector<16x64xf32>, vector<64x64xf32>, vector<16x64xf32> -> vector<16x64xf32>
    %c0_20 = arith.constant 0 : index
    %c0_21 = arith.constant 0 : index
    %38 = vector.load %arg7[%c0_20, %c0_21] : memref<1x64xf32, #tpu.memory_space<vmem>>, vector<1x64xf32>
    %39 = vector.broadcast %38 : vector<1x64xf32> to vector<16x64xf32>
    %40 = arith.addf %37, %39 : vector<16x64xf32>
    %c0_22 = arith.constant 0 : index
    %c0_23 = arith.constant 0 : index
    %41 = vector.load %arg8[%c0_22, %c0_23] : memref<16x64xf32, #tpu.memory_space<vmem>>, vector<16x64xf32>
    tpu.vector_store %arg8[%c0_22, %c0_23], %40 {strides = array<i32>} : memref<16x64xf32, #tpu.memory_space<vmem>>, vector<16x64xf32>,
    return
  }
  func.func @transform_0(%arg0: i32) -> (i32, i32) {
    %c0_i32 = arith.constant 0 : i32
    %c0_i32_0 = arith.constant 0 : i32
    return %arg0, %c0_i32 : i32, i32
  }
  func.func @transform_1(%arg0: i32) -> (i32, i32) {
    %c0_i32 = arith.constant 0 : i32
    %c0_i32_0 = arith.constant 0 : i32
    %c0_i32_1 = arith.constant 0 : i32
    return %c0_i32, %c0_i32_0 : i32, i32
  }
  func.func @transform_2(%arg0: i32) -> (i32, i32) {
    %c0_i32 = arith.constant 0 : i32
    %c0_i32_0 = arith.constant 0 : i32
    %c0_i32_1 = arith.constant 0 : i32
    return %c0_i32, %c0_i32_0 : i32, i32
  }
  func.func @transform_3(%arg0: i32) -> (i32, i32) {
    %c0_i32 = arith.constant 0 : i32
    %c0_i32_0 = arith.constant 0 : i32
    %c0_i32_1 = arith.constant 0 : i32
    return %c0_i32, %c0_i32_0 : i32, i32
  }
  func.func @transform_4(%arg0: i32) -> (i32, i32) {
    %c0_i32 = arith.constant 0 : i32
    %c0_i32_0 = arith.constant 0 : i32
    %c0_i32_1 = arith.constant 0 : i32
    return %c0_i32, %c0_i32_0 : i32, i32
  }
  func.func @transform_5(%arg0: i32) -> (i32, i32) {
    %c0_i32 = arith.constant 0 : i32
    %c0_i32_0 = arith.constant 0 : i32
    %c0_i32_1 = arith.constant 0 : i32
    return %c0_i32, %c0_i32_0 : i32, i32
  }
  func.func @transform_6(%arg0: i32) -> (i32, i32) {
    %c0_i32 = arith.constant 0 : i32
    %c0_i32_0 = arith.constant 0 : i32
    %c0_i32_1 = arith.constant 0 : i32
    return %c0_i32, %c0_i32_0 : i32, i32
  }
  func.func @transform_7(%arg0: i32) -> (i32, i32) {
    %c0_i32 = arith.constant 0 : i32
    %c0_i32_0 = arith.constant 0 : i32
    return %arg0, %c0_i32 : i32, i32
  }
}

</mosaic_0001>

<llo_original>
// kernel: tpu_custom_call.1
$region0: #{tpu_custom_call.1}
  #allocation0 [shape = 'u32[]', space=smem, size = 0x4, offset = 0x4, fixed_abs, tag = 'smem constant byte address 0x4 - core index']
  #allocation1 [shape = 'u32[72,128]{1,0:T(1,128)}', space=vmem, size = 0x9000, scoped, tag = 'internal scratch']
  %s0 = inlined_call_operand.hbm [shape: f32[16,32], index: 0, kind: input, shape index: {}]
  %s1 = inlined_call_operand.hbm [shape: f32[1,32], index: 1, kind: input, shape index: {}]
  %s2 = inlined_call_operand.vmem [shape: f32[1,32], index: 2, kind: input, shape index: {}]
  %s3 = inlined_call_operand.hbm [shape: f32[32,64], index: 3, kind: input, shape index: {}]
  %s4 = inlined_call_operand.vmem [shape: f32[1,64], index: 4, kind: input, shape index: {}]
  %s5 = inlined_call_operand.hbm [shape: f32[64,64], index: 5, kind: input, shape index: {}]
  %s6 = inlined_call_operand.vmem [shape: f32[1,64], index: 6, kind: input, shape index: {}]
  %s7 = inlined_call_operand.hbm [shape: f32[16,64], index: 7, kind: output, shape index: {}]
  %s8 = sld [smem:[#allocation0]]
  $region54: #{tpu_custom_call.1} parent=0
    _
  %s10 = ssub.s32 1, %s8
  %s11 = scalar_select 0, %s10, %s8
  $region1: #{tpu_custom_call.1} parent=0
    #allocation2 [shape = 'u8[8192]{0}', space=vmem, size = 0x2000, scoped, tag = 'input window, operand 0, single buffered']
    #allocation3 [shape = 's32[1]{0}', space=sflag, size = 0x4, scoped, tag = 'scoped memory for tpu_custom_call.1']
    #allocation4 [shape = 's32[1]{0}', space=sflag, size = 0x4, scoped, tag = 'scoped memory for tpu_custom_call.1']
    #allocation5 [shape = 'u8[512]{0}', space=vmem, size = 0x400, scoped, tag = 'input window, operand 1, single buffered']
    #allocation6 [shape = 's32[1]{0}', space=sflag, size = 0x4, scoped, tag = 'scoped memory for tpu_custom_call.1']
    #allocation7 [shape = 'u8[16384]{0}', space=vmem, size = 0x4000, scoped, tag = 'input window, operand 3, single buffered']
    #allocation8 [shape = 'u8[32768]{0}', space=vmem, size = 0x8000, scoped, tag = 'input window, operand 5, single buffered']
    #allocation9 [shape = 's32[1]{0}', space=sflag, size = 0x4, scoped, tag = 'scoped memory for tpu_custom_call.1']
    #allocation10 [shape = 'u8[8192]{0}', space=vmem, size = 0x2000, scoped, tag = 'output window, operand 0, single buffered']
    %12 = vsyncpa [#allocation3], 0
    %13 = vsyncpa [#allocation6], 0
    %14 = vsyncpa [#allocation9], 0
    %15 = vsyncpa [#allocation4], 0
    // Predicated region
    $region2: #{tpu_custom_call.1} parent=1 // pred_check
      _
    $region3: #{tpu_custom_call.1} parent=1 // pred_check_branch
      %17 = sbr.rel (0) target = $region5
    $region4: #{tpu_custom_call.1} parent=1 // pred_region
      %19 = vsyncadd [#allocation3], 0
      %s20 = sshll.u32 %s0, 4
      %s21 = int_to_ptr.hbm [resolvable:$true] %s20
      %s22 = sshll.u32 [#allocation2], 4
      %s23 = int_to_ptr.vmem [resolvable:$true] %s22
      %28 = dma.hbm_to_vmem [thread:$0]  %s21, 256, %s23, [#allocation3], 128, 128, 8
    $region5: #{tpu_custom_call.1} parent=1 // pred_fallthru
      _
    // Predicated region
    $region6: #{tpu_custom_call.1} parent=1 // pred_check
      _
    $region7: #{tpu_custom_call.1} parent=1 // pred_check_branch
      %30 = sbr.rel (0) target = $region9
    $region8: #{tpu_custom_call.1} parent=1 // pred_region
      %32 = vsyncadd [#allocation6], 0
      %s34 = sshll.u32 %s1, 4
      %s35 = int_to_ptr.hbm [resolvable:$true] %s34
      %s36 = sshll.u32 [#allocation5], 4
      %s37 = int_to_ptr.vmem [resolvable:$true] %s36
      %39 = dma.hbm_to_vmem [thread:$0]  %s35, 16, %s37, [#allocation6]
    $region9: #{tpu_custom_call.1} parent=1 // pred_fallthru
      _
    // Predicated region
    $region10: #{tpu_custom_call.1} parent=1 // pred_check
      _
    $region11: #{tpu_custom_call.1} parent=1 // pred_check_branch
      %41 = sbr.rel (0) target = $region13
    $region12: #{tpu_custom_call.1} parent=1 // pred_region
      _
    $region13: #{tpu_custom_call.1} parent=1 // pred_fallthru
      _
    // Predicated region
    $region14: #{tpu_custom_call.1} parent=1 // pred_check
      _
    $region15: #{tpu_custom_call.1} parent=1 // pred_check_branch
      %43 = sbr.rel (0) target = $region17
    $region16: #{tpu_custom_call.1} parent=1 // pred_region
      %45 = vsyncadd [#allocation6], 0
      %s46 = sshll.u32 %s3, 4
      %s47 = int_to_ptr.hbm [resolvable:$true] %s46
      %s48 = sshll.u32 [#allocation7], 4
      %s49 = int_to_ptr.vmem [resolvable:$true] %s48
      %54 = dma.hbm_to_vmem [thread:$0]  %s47, 512, %s49, [#allocation6], 128, 128, 8
    $region17: #{tpu_custom_call.1} parent=1 // pred_fallthru
      _
    // Predicated region
    $region18: #{tpu_custom_call.1} parent=1 // pred_check
      _
    $region19: #{tpu_custom_call.1} parent=1 // pred_check_branch
      %56 = sbr.rel (0) target = $region21
    $region20: #{tpu_custom_call.1} parent=1 // pred_region
      _
    $region21: #{tpu_custom_call.1} parent=1 // pred_fallthru
      _
    // Predicated region
    $region22: #{tpu_custom_call.1} parent=1 // pred_check
      _
    $region23: #{tpu_custom_call.1} parent=1 // pred_check_branch
      %58 = sbr.rel (0) target = $region25
    $region24: #{tpu_custom_call.1} parent=1 // pred_region
      %60 = vsyncadd [#allocation9], 0
      %s61 = sshll.u32 %s5, 4
      %s62 = int_to_ptr.hbm [resolvable:$true] %s61
      %s63 = sshll.u32 [#allocation8], 4
      %s64 = int_to_ptr.vmem [resolvable:$true] %s63
      %69 = dma.hbm_to_vmem [thread:$0]  %s62, 1024, %s64, [#allocation9], 128, 128, 8
    $region25: #{tpu_custom_call.1} parent=1 // pred_fallthru
      _
    // Predicated region
    $region26: #{tpu_custom_call.1} parent=1 // pred_check
      _
    $region27: #{tpu_custom_call.1} parent=1 // pred_check_branch
      %71 = sbr.rel (0) target = $region29
    $region28: #{tpu_custom_call.1} parent=1 // pred_region
      _
    $region29: #{tpu_custom_call.1} parent=1 // pred_fallthru
      _
    // Predicated region
    $region30: #{tpu_custom_call.1} parent=1 // pred_check
      _
    $region31: #{tpu_custom_call.1} parent=1 // pred_check_branch
      %73 = sbr.rel (0) target = $region33
    $region32: #{tpu_custom_call.1} parent=1 // pred_region
      %75 = dma.done [#allocation3], 256
    $region33: #{tpu_custom_call.1} parent=1 // pred_fallthru
      _
    // Predicated region
    $region34: #{tpu_custom_call.1} parent=1 // pred_check
      _
    $region35: #{tpu_custom_call.1} parent=1 // pred_check_branch
      %77 = sbr.rel (0) target = $region37
    $region36: #{tpu_custom_call.1} parent=1 // pred_region
      %79 = dma.done [#allocation6], 16
    $region37: #{tpu_custom_call.1} parent=1 // pred_fallthru
      _
    // Predicated region
    $region38: #{tpu_custom_call.1} parent=1 // pred_check
      _
    $region39: #{tpu_custom_call.1} parent=1 // pred_check_branch
      %81 = sbr.rel (0) target = $region41
    $region40: #{tpu_custom_call.1} parent=1 // pred_region
      %83 = dma.done [#allocation6], 512
    $region41: #{tpu_custom_call.1} parent=1 // pred_fallthru
      _
    // Predicated region
    $region42: #{tpu_custom_call.1} parent=1 // pred_check
      _
    $region43: #{tpu_custom_call.1} parent=1 // pred_check_branch
      %85 = sbr.rel (0) target = $region45
    $region44: #{tpu_custom_call.1} parent=1 // pred_region
      %87 = dma.done [#allocation9], 1024
    $region45: #{tpu_custom_call.1} parent=1 // pred_fallthru
      _
    %v88 = vld [vmem:[#allocation2] sm:$0xff]
    %v89 = vld [vmem:[#allocation2 + $0x8] sm:$0xff]
    %vm90 = vcmask 261120
    %v91 = vsel %vm90, %v88, 0.0
    %92 = vadd.xlane.f32.xlu0 %v91
    %v93 = vpop.xlane.xlu0 %92
    %v94 = vsel %vm90, %v89, 0.0
    %95 = vadd.xlane.f32.xlu0 %v94
    %v96 = vpop.xlane.xlu0 %95
    %v97 = vrcp.pop 32.0
    %v98 = vmul.f32 32.0, %v97
    %v99 = vsub.f32 1.0, %v98
    %v100 = vmul.f32 %v97, %v99
    %v101 = vadd.f32 %v97, %v100
    %vm102 = vweird.f32 %v97
    %v103 = vsel %vm102, %v97, %v101
    %v104 = vmul.f32 %v93, %v103
    %v105 = vmul.f32 %v96, %v103
    %v106 = vsub.f32 %v88, %v104
    %v107 = vsub.f32 %v89, %v105
    %v108 = vmul.f32 %v106, %v106
    %v109 = vmul.f32 %v107, %v107
    %v110 = vsel %vm90, %v108, 0.0
    %111 = vadd.xlane.f32.xlu0 %v110
    %v112 = vpop.xlane.xlu0 %111
    %v113 = vsel %vm90, %v109, 0.0
    %114 = vadd.xlane.f32.xlu0 %v113
    %v115 = vpop.xlane.xlu0 %114
    %v116 = vmul.f32 %v112, %v103
    %v117 = vmul.f32 %v115, %v103
    %v118 = vadd.f32 %v116, 1e-05
    %v119 = vadd.f32 %v117, 1e-05
    %v120 = vrsqrt.pop %v118
    %v121 = vmul.f32 %v120, %v118
    %v122 = vmul.f32 %v121, %v120
    %v123 = vmul.f32 0.5, %v122
    %v124 = vsub.f32 1.5, %v123
    %v125 = vmul.f32 %v120, %v124
    %vm126 = vweird.f32 %v118
    %vm127 = vweird.f32 %v120
    %vm128 = vmor %vm126, %vm127
    %v129 = vsel %vm128, %v120, %v125
    %v130 = vrsqrt.pop %v119
    %v131 = vmul.f32 %v130, %v119
    %v132 = vmul.f32 %v131, %v130
    %v133 = vmul.f32 0.5, %v132
    %v134 = vsub.f32 1.5, %v133
    %v135 = vmul.f32 %v130, %v134
    %vm136 = vweird.f32 %v119
    %vm137 = vweird.f32 %v130
    %vm138 = vmor %vm136, %vm137
    %v139 = vsel %vm138, %v130, %v135
    %v140 = vmul.f32 %v106, %v129
    %v141 = vmul.f32 %v107, %v139
    %v142 = vld [vmem:[#allocation5] sm:$0x1]
    %v144 = vperm.slane %v142, 0
    %v146 = vmul.f32 %v140, %v144
    %v147 = vmul.f32 %v141, %v144
    %v148 = vld [vmem:[%s2] sm:$0x1]
    %v150 = vperm.slane %v148, 0
    %v152 = vadd.f32 %v146, %v150
    %v153 = vadd.f32 %v147, %v150
    %v154 = vld [vmem:[#allocation7] sm:$0xff]
    %v155 = vld [vmem:[#allocation7 + $0x8] sm:$0xff]
    %v156 = vld [vmem:[#allocation7 + $0x10] sm:$0xff]
    %v157 = vld [vmem:[#allocation7 + $0x18] sm:$0xff]
    %v158 = vld [vmem:[%s4] sm:$0x1]
    %v160 = vperm.slane %v158, 0
    %v163 = vsel %vm90, %v152, 0
    %v166 = vsel %vm90, %v153, 0
    %168 = vmatpush.msra.mxu0 0.0
    %169 = vmatpush.msra.mxu0 0.0
    %170 = vmatpush.msra.mxu0 0.0
    %171 = vmatpush.msra.mxu0 0.0
    %172 = vmatpush.msra.mxu0 0.0
    %173 = vmatpush.msra.mxu0 0.0
    %174 = vmatpush.msra.mxu0 0.0
    %175 = vmatpush.msra.mxu0 0.0
    %176 = vmatpush.msra.mxu0 0.0
    %177 = vmatpush.msra.mxu0 0.0
    %178 = vmatpush.msra.mxu0 0.0
    %179 = vmatpush.msra.mxu0 0.0
    %180 = vmatpush.msra.mxu0 %v157
    %181 = vmatpush.msra.mxu0 %v156
    %182 = vmatpush.msra.mxu0 %v155
    %183 = vmatpush.msra.mxu0 %v154
    %184 = vmatmul.f32.gmra.mxu0 %v163
    %v185 = vpop.f32.mrf.mxu0
    %v186 = vadd.f32 %v160, %v185
    %187 = vmatmul.f32.gmra.mxu0 %v166
    %v188 = vpop.f32.mrf.mxu0
    %v189 = vadd.f32 %v160, %v188
    %190 = vdwg.mxu0
    %v191 = vmul.f32 %v186, 0.5
    %v192 = vmul.f32 %v189, 0.5
    %v193 = vmul.f32 %v186, 0.70710677
    %v194 = vmul.f32 %v189, 0.70710677
    %v195 = vmul.f32 %v193, %v193
    %v196 = vmin.f32 16.0, %v195
    %v197 = vmul.f32 %v196, 2.1237322e-06
    %v198 = vadd.f32 %v197, 0.00028619796
    %v199 = vmul.f32 %v196, %v198
    %v200 = vadd.f32 %v199, 0.0036580483
    %v201 = vmul.f32 %v196, %v200
    %v202 = vadd.f32 %v201, 0.05243302
    %v203 = vmul.f32 %v196, %v202
    %v204 = vadd.f32 %v203, 0.18741608
    %v205 = vmul.f32 %v196, %v204
    %v206 = vadd.f32 %v205, 1.1283791
    %v207 = vmul.f32 %v193, %v206
    %v208 = vmul.f32 %v196, 3.8918573e-05
    %v209 = vadd.f32 %v208, 0.001143296
    %v210 = vmul.f32 %v196, %v209
    %v211 = vadd.f32 %v210, 0.014752088
    %v212 = vmul.f32 %v196, %v211
    %v213 = vadd.f32 %v212, 0.112945676
    %v214 = vmul.f32 %v196, %v213
    %v215 = vadd.f32 %v214, 0.4994258
    %v216 = vmul.f32 %v196, %v215
    %v217 = vadd.f32 %v216, 1.0
    %v218 = vrcp.pop %v217
    %v219 = vmul.f32 %v217, %v218
    %v220 = vsub.f32 1.0, %v219
    %v221 = vmul.f32 %v218, %v220
    %v222 = vadd.f32 %v218, %v221
    %vm223 = vweird.f32 %v217
    %vm224 = vweird.f32 %v218
    %vm225 = vmor %vm223, %vm224
    %v226 = vsel %vm225, %v218, %v222
    %v227 = vand.u32 2147483647, %v217
    %vm228 = vcmp.eq.f32.partialorder %v227, 8.507059e+37
    %v229 = vand.u32 %v217, 2147483648
    %v230 = vor.u32 1.1754944e-38, %v229
    %v231 = vsel %vm228, %v230, %v226
    %v232 = vmul.f32 %v207, %v231
    %v233 = vmin.f32 %v232, 1.0
    %v234 = vmax.f32 %v233, -1.0
    %v235 = vmul.f32 %v194, %v194
    %v236 = vmin.f32 16.0, %v235
    %v237 = vmul.f32 %v236, 2.1237322e-06
    %v238 = vadd.f32 %v237, 0.00028619796
    %v239 = vmul.f32 %v236, %v238
    %v240 = vadd.f32 %v239, 0.0036580483
    %v241 = vmul.f32 %v236, %v240
    %v242 = vadd.f32 %v241, 0.05243302
    %v243 = vmul.f32 %v236, %v242
    %v244 = vadd.f32 %v243, 0.18741608
    %v245 = vmul.f32 %v236, %v244
    %v246 = vadd.f32 %v245, 1.1283791
    %v247 = vmul.f32 %v194, %v246
    %v248 = vmul.f32 %v236, 3.8918573e-05
    %v249 = vadd.f32 %v248, 0.001143296
    %v250 = vmul.f32 %v236, %v249
    %v251 = vadd.f32 %v250, 0.014752088
    %v252 = vmul.f32 %v236, %v251
    %v253 = vadd.f32 %v252, 0.112945676
    %v254 = vmul.f32 %v236, %v253
    %v255 = vadd.f32 %v254, 0.4994258
    %v256 = vmul.f32 %v236, %v255
    %v257 = vadd.f32 %v256, 1.0
    %v258 = vrcp.pop %v257
    %v259 = vmul.f32 %v257, %v258
    %v260 = vsub.f32 1.0, %v259
    %v261 = vmul.f32 %v258, %v260
    %v262 = vadd.f32 %v258, %v261
    %vm263 = vweird.f32 %v257
    %vm264 = vweird.f32 %v258
    %vm265 = vmor %vm263, %vm264
    %v266 = vsel %vm265, %v258, %v262
    %v267 = vand.u32 2147483647, %v257
    %vm268 = vcmp.eq.f32.partialorder %v267, 8.507059e+37
    %v269 = vand.u32 %v257, 2147483648
    %v270 = vor.u32 1.1754944e-38, %v269
    %v271 = vsel %vm268, %v270, %v266
    %v272 = vmul.f32 %v247, %v271
    %v273 = vmin.f32 %v272, 1.0
    %v274 = vmax.f32 %v273, -1.0
    %v275 = vadd.f32 %v234, 1.0
    %v276 = vadd.f32 %v274, 1.0
    %v277 = vmul.f32 %v191, %v275
    %v278 = vmul.f32 %v192, %v276
    %v279 = vld [vmem:[#allocation8] sm:$0xff]
    %v280 = vld [vmem:[#allocation8 + $0x8] sm:$0xff]
    %v281 = vld [vmem:[#allocation8 + $0x10] sm:$0xff]
    %v282 = vld [vmem:[#allocation8 + $0x18] sm:$0xff]
    %v283 = vld [vmem:[#allocation8 + $0x20] sm:$0xff]
    %v284 = vld [vmem:[#allocation8 + $0x28] sm:$0xff]
    %v285 = vld [vmem:[#allocation8 + $0x30] sm:$0xff]
    %v286 = vld [vmem:[#allocation8 + $0x38] sm:$0xff]
    %v287 = vld [vmem:[%s6] sm:$0x1]
    %v289 = vperm.slane %v287, 0
    %vm291 = vcmask 523264
    %v293 = vsel %vm291, %v277, 0
    %v296 = vsel %vm291, %v278, 0
    %298 = vmatpush.msra.mxu0 0.0
    %299 = vmatpush.msra.mxu0 0.0
    %300 = vmatpush.msra.mxu0 0.0
    %301 = vmatpush.msra.mxu0 0.0
    %302 = vmatpush.msra.mxu0 0.0
    %303 = vmatpush.msra.mxu0 0.0
    %304 = vmatpush.msra.mxu0 0.0
    %305 = vmatpush.msra.mxu0 0.0
    %306 = vmatpush.msra.mxu0 %v286
    %307 = vmatpush.msra.mxu0 %v285
    %308 = vmatpush.msra.mxu0 %v284
    %309 = vmatpush.msra.mxu0 %v283
    %310 = vmatpush.msra.mxu0 %v282
    %311 = vmatpush.msra.mxu0 %v281
    %312 = vmatpush.msra.mxu0 %v280
    %313 = vmatpush.msra.mxu0 %v279
    %314 = vmatmul.f32.gmra.mxu0 %v293
    %v315 = vpop.f32.mrf.mxu0
    %v316 = vadd.f32 %v289, %v315
    %317 = vmatmul.f32.gmra.mxu0 %v296
    %v318 = vpop.f32.mrf.mxu0
    %v319 = vadd.f32 %v289, %v318
    %320 = vdwg.mxu0
    %321 = vst.msk [vmem:[#allocation10] sm:$0xff] %vm291, %v316
    %322 = vst.msk [vmem:[#allocation10 + $0x8] sm:$0xff] %vm291, %v319
    // Predicated region
    $region46: #{tpu_custom_call.1} parent=1 // pred_check
      _
    $region47: #{tpu_custom_call.1} parent=1 // pred_check_branch
      %324 = sbr.rel (0) target = $region49
    $region48: #{tpu_custom_call.1} parent=1 // pred_region
      %326 = vsyncadd [#allocation4], 0
      %s327 = sshll.u32 [#allocation10], 4
      %s328 = int_to_ptr.vmem [resolvable:$true] %s327
      %s329 = sshll.u32 %s7, 4
      %s330 = int_to_ptr.hbm [resolvable:$true] %s329
      %335 = dma.vmem_to_hbm [thread:$0]  %s328, 256, %s330, [#allocation4], 128, 128, 8
    $region49: #{tpu_custom_call.1} parent=1 // pred_fallthru
      _
    // Predicated region
    $region50: #{tpu_custom_call.1} parent=1 // pred_check
      _
    $region51: #{tpu_custom_call.1} parent=1 // pred_check_branch
      %337 = sbr.rel (0) target = $region53
    $region52: #{tpu_custom_call.1} parent=1 // pred_region
      %339 = dma.done [#allocation4], 256
    $region53: #{tpu_custom_call.1} parent=1 // pred_fallthru
      _
    %340 = vsyncpa [#allocation3], 1
    %341 = vsyncpa [#allocation6], 1
    %342 = vsyncpa [#allocation9], 1
    %343 = vsyncpa [#allocation4], 1

</llo_original>
